<compile_context>
chip_gen: v7x
topology: tpu7x:2x2x1
jax: 0.10.0
libtpu: 0.0.40
codegen_flags: <defaults>
</compile_context>

<pallas_src>
import jax
import jax.numpy as jnp
from jax.experimental import pallas as pl
from jax.experimental.pallas import tpu as pltpu


# ---------------------------------------------------------------------------
# Kernel: gated blend of two row tiles with a shared per-feature gate
# ---------------------------------------------------------------------------
def _attention_kernel(w_ref, x_ref, y_ref, out_ref):
    # w_ref : (1, F)   attention weights (broadcast over rows)
    # x_ref : (T, F)   nn_output tile
    # y_ref : (T, F)   weights tile
    ctx = 1.0 / (1.0 + jnp.exp(-w_ref[...]))          # sigmoid -> EUP slot
    out_ref[...] = x_ref[...] * ctx + y_ref[...] * (1.0 - ctx)


# ---------------------------------------------------------------------------
# Wrapper
# ---------------------------------------------------------------------------
def attention_module_forward(attention_weights, nn_output, weights, *, tile_rows=256):
    """out = nn_output * sigmoid(w) + weights * (1 - sigmoid(w))."""
    assert nn_output.shape == weights.shape, "nn_output / weights shape mismatch"
    feat = attention_weights.shape[-1]
    assert nn_output.shape[-1] == feat, "feature dim mismatch"

    orig_shape = nn_output.shape
    orig_dtype = nn_output.dtype

    x = nn_output.reshape(-1, feat).astype(jnp.float32)
    y = weights.reshape(-1, feat).astype(jnp.float32)
    w = attention_weights.reshape(1, feat).astype(jnp.float32)

    rows = x.shape[0]
    # sublane-aligned row tile; pad rows so every block is full (no partial tiles)
    tr = max(8, min(int(tile_rows), ((rows + 7) // 8) * 8))
    tr = (tr // 8) * 8
    padded = ((rows + tr - 1) // tr) * tr
    if padded != rows:
        pad = padded - rows
        x = jnp.pad(x, ((0, pad), (0, 0)))
        y = jnp.pad(y, ((0, pad), (0, 0)))

    grid = (padded // tr,)

    out = pl.pallas_call(
        _attention_kernel,
        out_shape=jax.ShapeDtypeStruct((padded, feat), jnp.float32),
        grid=grid,
        in_specs=[
            pl.BlockSpec((1, feat), lambda i: (0, 0)),    # gate vector, shared per tile
            pl.BlockSpec((tr, feat), lambda i: (i, 0)),   # nn_output row tile
            pl.BlockSpec((tr, feat), lambda i: (i, 0)),   # weights row tile
        ],
        out_specs=pl.BlockSpec((tr, feat), lambda i: (i, 0)),
        compiler_params=pltpu.CompilerParams(
            dimension_semantics=("parallel",),            # rows independent -> megacore
        ),
    )(w, x, y)

    if padded != rows:
        out = out[:rows]
    return out.reshape(orig_shape).astype(orig_dtype)


# ---------------------------------------------------------------------------
# demo
# ---------------------------------------------------------------------------
if __name__ == "__main__":
    key = jax.random.PRNGKey(0)
    kw, kx, ky = jax.random.split(key, 3)

    feature_size = 128            # lane-dense feature dim
    batch, seq = 8, 32            # -> 256 rows of 128 lanes

    attention_weights = jax.random.normal(kw, (feature_size,), jnp.float32)
    nn_output = jax.random.normal(kx, (batch, seq, feature_size), jnp.float32)
    weights = jax.random.normal(ky, (batch, seq, feature_size), jnp.float32)

    out = attention_module_forward(attention_weights, nn_output, weights, tile_rows=128)
    out = jax.block_until_ready(out)

    # reference check (pure JAX)
    ctx = jax.nn.sigmoid(attention_weights)
    ref = nn_output * ctx + weights * (1.0 - ctx)

    assert out.shape == nn_output.shape and out.dtype == nn_output.dtype
    assert bool(jnp.all(jnp.isfinite(out)))
    assert bool(jnp.allclose(out, ref, atol=1e-6, rtol=1e-6))
    print("KERNEL_OK")
</pallas_src>

<mosaic_0001>
module attributes {stable_mosaic.version = 11 : i64} {
  func.func @_attention_kernel(%arg0: i32, %arg1: memref<1x128xf32, #tpu.memory_space<vmem>>, %arg2: memref<128x128xf32, #tpu.memory_space<vmem>>, %arg3: memref<128x128xf32, #tpu.memory_space<vmem>>, %arg4: memref<128x128xf32, #tpu.memory_space<vmem>>) attributes {dimension_semantics = [#tpu.dimension_semantics<parallel>], iteration_bounds = array<i64: 2>, scalar_prefetch = 0 : i64, scratch_operands = 0 : i64, tpu.core_type = #tpu.core_type<tc>, window_params = [{pipeline_mode = #tpu.pipeline_mode<synchronous>, transform_indices = @transform_0, window_bounds = array<i64: 1, 128>}, {transform_indices = @transform_1, window_bounds = array<i64: 128, 128>}, {transform_indices = @transform_2, window_bounds = array<i64: 128, 128>}, {transform_indices = @transform_3, window_bounds = array<i64: 128, 128>}]} {
    %c0 = arith.constant 0 : index
    %c0_0 = arith.constant 0 : index
    %0 = vector.load %arg1[%c0, %c0_0] : memref<1x128xf32, #tpu.memory_space<vmem>>, vector<1x128xf32>
    %cst = arith.constant 0.000000e+00 : f32
    %1 = vector.broadcast %cst : f32 to vector<1x128xf32>
    %2 = arith.subf %1, %0 : vector<1x128xf32>
    %3 = math.exp %2 : vector<1x128xf32>
    %cst_1 = arith.constant 1.000000e+00 : f32
    %4 = vector.broadcast %cst_1 : f32 to vector<1x128xf32>
    %5 = arith.addf %4, %3 : vector<1x128xf32>
    %cst_2 = arith.constant 1.000000e+00 : f32
    %6 = vector.broadcast %cst_2 : f32 to vector<1x128xf32>
    %7 = arith.divf %6, %5 : vector<1x128xf32>
    %c0_3 = arith.constant 0 : index
    %c0_4 = arith.constant 0 : index
    %8 = vector.load %arg2[%c0_3, %c0_4] : memref<128x128xf32, #tpu.memory_space<vmem>>, vector<128x128xf32>
    %9 = vector.broadcast %7 : vector<1x128xf32> to vector<128x128xf32>
    %10 = arith.mulf %8, %9 : vector<128x128xf32>
    %c0_5 = arith.constant 0 : index
    %c0_6 = arith.constant 0 : index
    %11 = vector.load %arg3[%c0_5, %c0_6] : memref<128x128xf32, #tpu.memory_space<vmem>>, vector<128x128xf32>
    %cst_7 = arith.constant 1.000000e+00 : f32
    %12 = vector.broadcast %cst_7 : f32 to vector<1x128xf32>
    %13 = arith.subf %12, %7 : vector<1x128xf32>
    %14 = vector.broadcast %13 : vector<1x128xf32> to vector<128x128xf32>
    %15 = arith.mulf %11, %14 : vector<128x128xf32>
    %16 = arith.addf %10, %15 : vector<128x128xf32>
    %c0_8 = arith.constant 0 : index
    %c0_9 = arith.constant 0 : index
    %17 = vector.load %arg4[%c0_8, %c0_9] : memref<128x128xf32, #tpu.memory_space<vmem>>, vector<128x128xf32>
    tpu.vector_store %arg4[%c0_8, %c0_9], %16 {strides = array<i32>} : memref<128x128xf32, #tpu.memory_space<vmem>>, vector<128x128xf32>,
    return
  }
  func.func @transform_0(%arg0: i32) -> (i32, i32) {
    %c0_i32 = arith.constant 0 : i32
    %c0_i32_0 = arith.constant 0 : i32
    %c0_i32_1 = arith.constant 0 : i32
    return %c0_i32, %c0_i32_0 : i32, i32
  }
  func.func @transform_1(%arg0: i32) -> (i32, i32) {
    %c0_i32 = arith.constant 0 : i32
    %c0_i32_0 = arith.constant 0 : i32
    return %arg0, %c0_i32 : i32, i32
  }
  func.func @transform_2(%arg0: i32) -> (i32, i32) {
    %c0_i32 = arith.constant 0 : i32
    %c0_i32_0 = arith.constant 0 : i32
    return %arg0, %c0_i32 : i32, i32
  }
  func.func @transform_3(%arg0: i32) -> (i32, i32) {
    %c0_i32 = arith.constant 0 : i32
    %c0_i32_0 = arith.constant 0 : i32
    return %arg0, %c0_i32 : i32, i32
  }
}

</mosaic_0001>

<llo_original>
// kernel: tpu_custom_call.1
$region0: #{tpu_custom_call.1}
  #allocation0 [shape = 'u32[]', space=smem, size = 0x4, offset = 0x4, fixed_abs, tag = 'smem constant byte address 0x4 - core index']
  #allocation1 [shape = 'u32[144,128]{1,0:T(1,128)}', space=vmem, size = 0x12000, scoped, tag = 'internal scratch']
  %s0 = inlined_call_operand.hbm [shape: f32[1,128], index: 0, kind: input, shape index: {}]
  %s1 = inlined_call_operand.hbm [shape: f32[256,128], index: 1, kind: input, shape index: {}]
  %s2 = inlined_call_operand.hbm [shape: f32[256,128], index: 2, kind: input, shape index: {}]
  %s3 = inlined_call_operand.hbm [shape: f32[256,128], index: 3, kind: output, shape index: {}]
  %s4 = sld [smem:[#allocation0]]
  $region57: #{tpu_custom_call.1} parent=0
    _
  %s6 = ssub.s32 1, %s4
  %s7 = scalar_select 0, %s6, %s4
  $region1: #{tpu_custom_call.1} parent=0
    #allocation2 [shape = 'u8[512]{0}', space=vmem, size = 0x400, scoped, tag = 'input window, operand 0, single buffered']
    #allocation3 [shape = 's32[2]{0}', space=sflag, size = 0x8, scoped, tag = 'scoped memory for tpu_custom_call.1']
    #allocation4 [shape = 's32[2]{0}', space=sflag, size = 0x8, scoped, tag = 'scoped memory for tpu_custom_call.1']
    #allocation5 [shape = 'u8[131072]{0}', space=vmem, size = 0x20000, scoped, tag = 'input window, operand 1']
    #allocation6 [shape = 's32[2]{0}', space=sflag, size = 0x8, scoped, tag = 'scoped memory for tpu_custom_call.1']
    #allocation7 [shape = 'u8[131072]{0}', space=vmem, size = 0x20000, scoped, tag = 'input window, operand 2']
    #allocation8 [shape = 'u8[131072]{0}', space=vmem, size = 0x20000, scoped, tag = 'output window, operand 0']
    %8 = vsyncpa [#allocation3], 0
    %9 = vsyncpa [#allocation6], 0
    %s10 = scalar_lea.sflag [#allocation6], 1
    %11 = vsyncpa %s10, 0
    %12 = vsyncpa [#allocation4], 0
    %s13 = scalar_lea.sflag [#allocation4], 1
    %14 = vsyncpa %s13, 0
    loop: start=0, step=1, limit=4
    $region2: #{tpu_custom_call.1} parent=1 // loop_pre_header
      _
    $region3: #{tpu_custom_call.1} parent=1 // loop_header
      %s16 = sphi 0, %s20
      %p17 = scmp.ge.s32.totalorder %s16, 4
      %s24 = sphi 0, %s24
      %s26 = sphi 0, %s24
      %s27 = sphi 0, %s26
      %s41 = sphi 0, %s27
      %s47 = sphi 0, %s49
      %s50 = sphi 0, %s47
      %s51 = sphi 0, %s50
      %s67 = sphi 0, %s51
      %s73 = sphi 0, %s75
      %s76 = sphi 0, %s73
      %s77 = sphi 0, %s76
      %s93 = sphi 0, %s77
      %s99 = sphi 0, %s101
      %s102 = sphi 0, %s99
      %s103 = sphi 0, %s102
      %s119 = sphi 0, %s103
    $region4: #{tpu_custom_call.1} parent=1 // loop_header_branch
      %19 = sbr.rel (%p17) target = $region8
    $region5: #{tpu_custom_call.1} parent=1 // loop_body
      %s21 = ssub.s32 %s16, 1
      %s22 = ssub.s32 %s16, 2
      %s23 = sadd.s32 %s16, 1
      %s25 = sadd.s32 %s24, 1
      %p28 = scmp.eq.s32.totalorder %s16, 1
      %p29 = scmp.ne.s32.totalorder %s24, %s26
      %p30 = scmp.eq.s32.totalorder %s16, 0
      %p31 = por %p29, %p30
      %p32 = scmp.ne.s32.totalorder %s24, %s26
      %p33 = scmp.eq.s32.totalorder %s21, 1
      %p34 = por %p32, %p33
      %p35 = scmp.ne.s32.totalorder %s26, %s27
      %p36 = scmp.eq.s32.totalorder %s21, 0
      %p37 = por %p35, %p36
      %p38 = scmp.ne.s32.totalorder %s26, %s27
      %p39 = scmp.eq.s32.totalorder %s22, 1
      %p40 = por %p38, %p39
      %p42 = scmp.ne.s32.totalorder %s27, %s41
      %p43 = scmp.eq.s32.totalorder %s22, 0
      %p44 = por %p42, %p43
      %s45 = ssub.s32 %s16, %s23
      %p46 = scmp.eq.s32.totalorder %s45, 0
      %s48 = sadd.s32 %s47, 1
      %s49 = scalar_select %p46, %s47, %s48
      %p52 = pneg %p46
      %p53 = scmp.eq.s32.totalorder %s16, 1
      %p54 = por %p52, %p53
      %p55 = scmp.ne.s32.totalorder %s47, %s50
      %p56 = scmp.eq.s32.totalorder %s16, 0
      %p57 = por %p55, %p56
      %p58 = scmp.ne.s32.totalorder %s47, %s50
      %p59 = scmp.eq.s32.totalorder %s21, 1
      %p60 = por %p58, %p59
      %p61 = scmp.ne.s32.totalorder %s50, %s51
      %p62 = scmp.eq.s32.totalorder %s21, 0
      %p63 = por %p61, %p62
      %p64 = scmp.ne.s32.totalorder %s50, %s51
      %p65 = scmp.eq.s32.totalorder %s22, 1
      %p66 = por %p64, %p65
      %p68 = scmp.ne.s32.totalorder %s51, %s67
      %p69 = scmp.eq.s32.totalorder %s22, 0
      %p70 = por %p68, %p69
      %s71 = ssub.s32 %s16, %s23
      %p72 = scmp.eq.s32.totalorder %s71, 0
      %s74 = sadd.s32 %s73, 1
      %s75 = scalar_select %p72, %s73, %s74
      %p78 = pneg %p72
      %p79 = scmp.eq.s32.totalorder %s16, 1
      %p80 = por %p78, %p79
      %p81 = scmp.ne.s32.totalorder %s73, %s76
      %p82 = scmp.eq.s32.totalorder %s16, 0
      %p83 = por %p81, %p82
      %p84 = scmp.ne.s32.totalorder %s73, %s76
      %p85 = scmp.eq.s32.totalorder %s21, 1
      %p86 = por %p84, %p85
      %p87 = scmp.ne.s32.totalorder %s76, %s77
      %p88 = scmp.eq.s32.totalorder %s21, 0
      %p89 = por %p87, %p88
      %p90 = scmp.ne.s32.totalorder %s76, %s77
      %p91 = scmp.eq.s32.totalorder %s22, 1
      %p92 = por %p90, %p91
      %p94 = scmp.ne.s32.totalorder %s77, %s93
      %p95 = scmp.eq.s32.totalorder %s22, 0
      %p96 = por %p94, %p95
      %s97 = ssub.s32 %s16, %s23
      %p98 = scmp.eq.s32.totalorder %s97, 0
      %s100 = sadd.s32 %s99, 1
      %s101 = scalar_select %p98, %s99, %s100
      %p104 = pneg %p98
      %p105 = scmp.eq.s32.totalorder %s16, 1
      %p106 = por %p104, %p105
      %p107 = scmp.ne.s32.totalorder %s99, %s102
      %p108 = scmp.eq.s32.totalorder %s16, 0
      %p109 = por %p107, %p108
      %p110 = scmp.ne.s32.totalorder %s99, %s102
      %p111 = scmp.eq.s32.totalorder %s21, 1
      %p112 = por %p110, %p111
      %p113 = scmp.ne.s32.totalorder %s102, %s103
      %p114 = scmp.eq.s32.totalorder %s21, 0
      %p115 = por %p113, %p114
      %p116 = scmp.ne.s32.totalorder %s102, %s103
      %p117 = scmp.eq.s32.totalorder %s22, 1
      %p118 = por %p116, %p117
      %p120 = scmp.ne.s32.totalorder %s103, %s119
      %p121 = scmp.eq.s32.totalorder %s22, 0
      %p122 = por %p120, %p121
      %p123 = scmp.le.s32.totalorder 1, %s16
      %p124 = scmp.lt.s32.totalorder %s16, 3
      %p125 = pnand %p123, %p124
      %p126 = pneg %p125
      // Predicated region
      $region9: #{tpu_custom_call.1} parent=5 // pred_check
        _
      $region10: #{tpu_custom_call.1} parent=5 // pred_check_branch
        %128 = sbr.rel (%p125) target = $region12
      $region11: #{tpu_custom_call.1} parent=5 // pred_region
        %s129 = ssub.s32 %s16, 1
        // Predicated region
        $region13: #{tpu_custom_call.1} parent=11 // pred_check
          %p130 = pneg %p37
        $region14: #{tpu_custom_call.1} parent=11 // pred_check_branch
          %132 = sbr.rel (%p130) target = $region16
        $region15: #{tpu_custom_call.1} parent=11 // pred_region
          %s134 = ssub.s32 16, 16
          %135 = vsyncadd [#allocation3], %s134
          %s137 = sshll.u32 [#allocation2], 4
          %s138 = int_to_ptr.vmem [resolvable:$true] %s137
          %140 = dma.hbm_to_vmem [thread:$0]  %s0, 16, %s138, [#allocation3]
        $region16: #{tpu_custom_call.1} parent=11 // pred_fallthru
          _
      $region12: #{tpu_custom_call.1} parent=5 // pred_fallthru
        _
      %p141 = scmp.lt.s32.totalorder %s16, 2
      // Predicated region
      $region17: #{tpu_custom_call.1} parent=5 // pred_check
        %p142 = pneg %p141
      $region18: #{tpu_custom_call.1} parent=5 // pred_check_branch
        %144 = sbr.rel (%p142) target = $region20
      $region19: #{tpu_custom_call.1} parent=5 // pred_region
        // Predicated region
        $region21: #{tpu_custom_call.1} parent=19 // pred_check
          %p145 = pneg %p57
        $region22: #{tpu_custom_call.1} parent=19 // pred_check_branch
          %147 = sbr.rel (%p145) target = $region24
        $region23: #{tpu_custom_call.1} parent=19 // pred_region
          %s148 = sand.u32 %s16, 1
          %s149 = scalar_lea.sflag [#allocation6], %s148
          %s150 = sand.u32 %s47, 1
          %s151 = smul.addr %s150, 128
          %s152 = scalar_lea.vmem [#allocation5], %s151
          %s153 = smul.u32 16, %s16
          %s155 = ssub.s32 2048, 2048
          %156 = vsyncadd %s149, %s155
          %s157 = smul.addr %s153, 128
          %s158 = scalar_lea.hbm %s1, %s157
          %s159 = sshll.u32 %s152, 4
          %s160 = int_to_ptr.vmem [resolvable:$true] %s159
          %165 = dma.hbm_to_vmem [thread:$0]  %s158, 2048, %s160, %s149, 128, 128, 8
        $region24: #{tpu_custom_call.1} parent=19 // pred_fallthru
          _
        // Predicated region
        $region25: #{tpu_custom_call.1} parent=19 // pred_check
          %p166 = pneg %p83
        $region26: #{tpu_custom_call.1} parent=19 // pred_check_branch
          %168 = sbr.rel (%p166) target = $region28
        $region27: #{tpu_custom_call.1} parent=19 // pred_region
          %s169 = sand.u32 %s16, 1
          %s170 = scalar_lea.sflag [#allocation6], %s169
          %s171 = sand.u32 %s73, 1
          %s172 = smul.addr %s171, 128
          %s173 = scalar_lea.vmem [#allocation7], %s172
          %s174 = smul.u32 16, %s16
          %s176 = ssub.s32 2048, 2048
          %177 = vsyncadd %s170, %s176
          %s178 = smul.addr %s174, 128
          %s179 = scalar_lea.hbm %s2, %s178
          %s180 = sshll.u32 %s173, 4
          %s181 = int_to_ptr.vmem [resolvable:$true] %s180
          %186 = dma.hbm_to_vmem [thread:$0]  %s179, 2048, %s181, %s170, 128, 128, 8
        $region28: #{tpu_custom_call.1} parent=19 // pred_fallthru
          _
      $region20: #{tpu_custom_call.1} parent=5 // pred_fallthru
        _
      %p187 = scmp.le.s32.totalorder 1, %s16
      %p188 = scmp.lt.s32.totalorder %s16, 3
      %p189 = pnand %p187, %p188
      %p190 = pneg %p189
      // Predicated region
      $region29: #{tpu_custom_call.1} parent=5 // pred_check
        _
      $region30: #{tpu_custom_call.1} parent=5 // pred_check_branch
        %192 = sbr.rel (%p189) target = $region32
      $region31: #{tpu_custom_call.1} parent=5 // pred_region
        %s193 = ssub.s32 %s16, 1
        // Predicated region
        $region33: #{tpu_custom_call.1} parent=31 // pred_check
          %p194 = pneg %p37
        $region34: #{tpu_custom_call.1} parent=31 // pred_check_branch
          %196 = sbr.rel (%p194) target = $region36
        $region35: #{tpu_custom_call.1} parent=31 // pred_region
          %197 = dma.done [#allocation3], 16
        $region36: #{tpu_custom_call.1} parent=31 // pred_fallthru
          _
        %s198 = sand.u32 %s21, 1
        %s199 = scalar_lea.sflag [#allocation6], %s198
        %s200 = sand.u32 %s50, 1
        %s201 = smul.addr %s200, 128
        %s202 = scalar_lea.vmem [#allocation5], %s201
        // Predicated region
        $region37: #{tpu_custom_call.1} parent=31 // pred_check
          %p203 = pneg %p63
        $region38: #{tpu_custom_call.1} parent=31 // pred_check_branch
          %205 = sbr.rel (%p203) target = $region40
        $region39: #{tpu_custom_call.1} parent=31 // pred_region
          %206 = dma.done %s199, 2048
        $region40: #{tpu_custom_call.1} parent=31 // pred_fallthru
          _
        %s207 = sand.u32 %s21, 1
        %s208 = scalar_lea.sflag [#allocation6], %s207
        %s209 = sand.u32 %s76, 1
        %s210 = smul.addr %s209, 128
        %s211 = scalar_lea.vmem [#allocation7], %s210
        // Predicated region
        $region41: #{tpu_custom_call.1} parent=31 // pred_check
          %p212 = pneg %p89
        $region42: #{tpu_custom_call.1} parent=31 // pred_check_branch
          %214 = sbr.rel (%p212) target = $region44
        $region43: #{tpu_custom_call.1} parent=31 // pred_region
          %215 = dma.done %s208, 2048
        $region44: #{tpu_custom_call.1} parent=31 // pred_fallthru
          _
        %p216 = pneg %p37
        %p217 = pneg %p34
        %s218 = sand.u32 %s21, 1
        %s219 = scalar_lea.sflag [#allocation6], %s218
        %s220 = sand.u32 %s50, 1
        %s221 = smul.addr %s220, 128
        %s222 = scalar_lea.vmem [#allocation5], %s221
        %p223 = pneg %p63
        %p224 = pneg %p60
        %s225 = sand.u32 %s21, 1
        %s226 = scalar_lea.sflag [#allocation6], %s225
        %s227 = sand.u32 %s76, 1
        %s228 = smul.addr %s227, 128
        %s229 = scalar_lea.vmem [#allocation7], %s228
        %p230 = pneg %p89
        %p231 = pneg %p86
        %p232 = pneg %p115
        %p233 = pneg %p112
        %s234 = sand.u32 %s102, 1
        %s235 = scalar_lea.sflag [#allocation4], %s234
        %s236 = sand.u32 %s102, 1
        %s237 = smul.addr %s236, 128
        %s238 = scalar_lea.vmem [#allocation8], %s237
        %s239 = smul.u32 16, %s21
        %s240 = smul.u32 16, %s21
        %s241 = smul.u32 16, %s21
        %v242 = vld [vmem:[#allocation2] sm:$0x1]
        %v243 = vsub.f32 0.0, %v242
        %v244 = vmul.f32 %v243, 1.442695
        %v245 = vpow.pop %v244
        %v246 = vadd.f32 %v245, 1.0
        %v247 = vrcp.pop %v246
        %v248 = vmul.f32 1.0, %v247
        %v249 = vld [vmem:[%s202] sm:$0xff]
        %v250 = vld [vmem:[%s202 + $0x8] sm:$0xff]
        %v251 = vld [vmem:[%s202 + $0x10] sm:$0xff]
        %v252 = vld [vmem:[%s202 + $0x18] sm:$0xff]
        %v253 = vld [vmem:[%s202 + $0x20] sm:$0xff]
        %v254 = vld [vmem:[%s202 + $0x28] sm:$0xff]
        %v255 = vld [vmem:[%s202 + $0x30] sm:$0xff]
        %v256 = vld [vmem:[%s202 + $0x38] sm:$0xff]
        %v257 = vld [vmem:[%s202 + $0x40] sm:$0xff]
        %v258 = vld [vmem:[%s202 + $0x48] sm:$0xff]
        %v259 = vld [vmem:[%s202 + $0x50] sm:$0xff]
        %v260 = vld [vmem:[%s202 + $0x58] sm:$0xff]
        %v261 = vld [vmem:[%s202 + $0x60] sm:$0xff]
        %v262 = vld [vmem:[%s202 + $0x68] sm:$0xff]
        %v263 = vld [vmem:[%s202 + $0x70] sm:$0xff]
        %v264 = vld [vmem:[%s202 + $0x78] sm:$0xff]
        %v266 = vlaneseq
        %v267 = vshrl.u32 %v266, 7
        %v268 = vsub.s32 0, %v267
        %v269 = vrot.slane %v248, %v268
        %v271 = vmul.f32 %v249, %v269
        %v272 = vmul.f32 %v250, %v269
        %v273 = vmul.f32 %v251, %v269
        %v274 = vmul.f32 %v252, %v269
        %v275 = vmul.f32 %v253, %v269
        %v276 = vmul.f32 %v254, %v269
        %v277 = vmul.f32 %v255, %v269
        %v278 = vmul.f32 %v256, %v269
        %v279 = vmul.f32 %v257, %v269
        %v280 = vmul.f32 %v258, %v269
        %v281 = vmul.f32 %v259, %v269
        %v282 = vmul.f32 %v260, %v269
        %v283 = vmul.f32 %v261, %v269
        %v284 = vmul.f32 %v262, %v269
        %v285 = vmul.f32 %v263, %v269
        %v286 = vmul.f32 %v264, %v269
        %v287 = vld [vmem:[%s211] sm:$0xff]
        %v288 = vld [vmem:[%s211 + $0x8] sm:$0xff]
        %v289 = vld [vmem:[%s211 + $0x10] sm:$0xff]
        %v290 = vld [vmem:[%s211 + $0x18] sm:$0xff]
        %v291 = vld [vmem:[%s211 + $0x20] sm:$0xff]
        %v292 = vld [vmem:[%s211 + $0x28] sm:$0xff]
        %v293 = vld [vmem:[%s211 + $0x30] sm:$0xff]
        %v294 = vld [vmem:[%s211 + $0x38] sm:$0xff]
        %v295 = vld [vmem:[%s211 + $0x40] sm:$0xff]
        %v296 = vld [vmem:[%s211 + $0x48] sm:$0xff]
        %v297 = vld [vmem:[%s211 + $0x50] sm:$0xff]
        %v298 = vld [vmem:[%s211 + $0x58] sm:$0xff]
        %v299 = vld [vmem:[%s211 + $0x60] sm:$0xff]
        %v300 = vld [vmem:[%s211 + $0x68] sm:$0xff]
        %v301 = vld [vmem:[%s211 + $0x70] sm:$0xff]
        %v302 = vld [vmem:[%s211 + $0x78] sm:$0xff]
        %v303 = vsub.f32 1.0, %v248
        %v305 = vlaneseq
        %v306 = vshrl.u32 %v305, 7
        %v307 = vsub.s32 0, %v306
        %v308 = vrot.slane %v303, %v307
        %v310 = vmul.f32 %v287, %v308
        %v311 = vmul.f32 %v288, %v308
        %v312 = vmul.f32 %v289, %v308
        %v313 = vmul.f32 %v290, %v308
        %v314 = vmul.f32 %v291, %v308
        %v315 = vmul.f32 %v292, %v308
        %v316 = vmul.f32 %v293, %v308
        %v317 = vmul.f32 %v294, %v308
        %v318 = vmul.f32 %v295, %v308
        %v319 = vmul.f32 %v296, %v308
        %v320 = vmul.f32 %v297, %v308
        %v321 = vmul.f32 %v298, %v308
        %v322 = vmul.f32 %v299, %v308
        %v323 = vmul.f32 %v300, %v308
        %v324 = vmul.f32 %v301, %v308
        %v325 = vmul.f32 %v302, %v308
        %v326 = vadd.f32 %v271, %v310
        %v327 = vadd.f32 %v272, %v311
        %v328 = vadd.f32 %v273, %v312
        %v329 = vadd.f32 %v274, %v313
        %v330 = vadd.f32 %v275, %v314
        %v331 = vadd.f32 %v276, %v315
        %v332 = vadd.f32 %v277, %v316
        %v333 = vadd.f32 %v278, %v317
        %v334 = vadd.f32 %v279, %v318
        %v335 = vadd.f32 %v280, %v319
        %v336 = vadd.f32 %v281, %v320
        %v337 = vadd.f32 %v282, %v321
        %v338 = vadd.f32 %v283, %v322
        %v339 = vadd.f32 %v284, %v323
        %v340 = vadd.f32 %v285, %v324
        %v341 = vadd.f32 %v286, %v325
        %342 = vst [vmem:[%s238] sm:$0xff] %v326
        %343 = vst [vmem:[%s238 + $0x8] sm:$0xff] %v327
        %344 = vst [vmem:[%s238 + $0x10] sm:$0xff] %v328
        %345 = vst [vmem:[%s238 + $0x18] sm:$0xff] %v329
        %346 = vst [vmem:[%s238 + $0x20] sm:$0xff] %v330
        %347 = vst [vmem:[%s238 + $0x28] sm:$0xff] %v331
        %348 = vst [vmem:[%s238 + $0x30] sm:$0xff] %v332
        %349 = vst [vmem:[%s238 + $0x38] sm:$0xff] %v333
        %350 = vst [vmem:[%s238 + $0x40] sm:$0xff] %v334
        %351 = vst [vmem:[%s238 + $0x48] sm:$0xff] %v335
        %352 = vst [vmem:[%s238 + $0x50] sm:$0xff] %v336
        %353 = vst [vmem:[%s238 + $0x58] sm:$0xff] %v337
        %354 = vst [vmem:[%s238 + $0x60] sm:$0xff] %v338
        %355 = vst [vmem:[%s238 + $0x68] sm:$0xff] %v339
        %356 = vst [vmem:[%s238 + $0x70] sm:$0xff] %v340
        %357 = vst [vmem:[%s238 + $0x78] sm:$0xff] %v341
        %s358 = sand.u32 %s102, 1
        %s359 = scalar_lea.sflag [#allocation4], %s358
        %s360 = sand.u32 %s102, 1
        %s361 = smul.addr %s360, 128
        %s362 = scalar_lea.vmem [#allocation8], %s361
        // Predicated region
        $region45: #{tpu_custom_call.1} parent=31 // pred_check
          %p363 = pneg %p112
        $region46: #{tpu_custom_call.1} parent=31 // pred_check_branch
          %365 = sbr.rel (%p363) target = $region48
        $region47: #{tpu_custom_call.1} parent=31 // pred_region
          %s366 = smul.u32 16, %s21
          %s368 = ssub.s32 2048, 2048
          %369 = vsyncadd %s359, %s368
          %s370 = smul.addr %s366, 128
          %s371 = scalar_lea.hbm %s3, %s370
          %s372 = sshll.u32 %s362, 4
          %s373 = int_to_ptr.vmem [resolvable:$true] %s372
          %378 = dma.vmem_to_hbm [thread:$0]  %s373, 2048, %s371, %s359, 128, 128, 8
        $region48: #{tpu_custom_call.1} parent=31 // pred_fallthru
          _
      $region32: #{tpu_custom_call.1} parent=5 // pred_fallthru
        _
      %p379 = scmp.le.s32.totalorder 2, %s16
      // Predicated region
      $region49: #{tpu_custom_call.1} parent=5 // pred_check
        %p380 = pneg %p379
      $region50: #{tpu_custom_call.1} parent=5 // pred_check_branch
        %382 = sbr.rel (%p380) target = $region52
      $region51: #{tpu_custom_call.1} parent=5 // pred_region
        %s383 = ssub.s32 %s16, 2
        // Predicated region
        $region53: #{tpu_custom_call.1} parent=51 // pred_check
          %p384 = pneg %p118
        $region54: #{tpu_custom_call.1} parent=51 // pred_check_branch
          %386 = sbr.rel (%p384) target = $region56
        $region55: #{tpu_custom_call.1} parent=51 // pred_region
          %s387 = sand.u32 %s103, 1
          %s388 = scalar_lea.sflag [#allocation4], %s387
          %s389 = sand.u32 %s103, 1
          %s390 = smul.addr %s389, 128
          %s391 = scalar_lea.vmem [#allocation8], %s390
          %392 = dma.done %s388, 2048
        $region56: #{tpu_custom_call.1} parent=51 // pred_fallthru
          _
      $region52: #{tpu_custom_call.1} parent=5 // pred_fallthru
        _
    $region6: #{tpu_custom_call.1} parent=1 // loop_footer
      %s20 = sadd.s32 1, %s16
    $region7: #{tpu_custom_call.1} parent=1 // loop_footer_branch
      %15 = sbr.rel target = $region3
    $region8: #{tpu_custom_call.1} parent=1 // loop_exit
      _
    %393 = vsyncpa [#allocation3], 1
    %s394 = scalar_lea.sflag [#allocation3], 1
    %395 = vsyncpa %s394, 1
    %396 = vsyncpa [#allocation6], 1
    %s397 = scalar_lea.sflag [#allocation6], 1
    %398 = vsyncpa %s397, 1
    %399 = vsyncpa [#allocation4], 1
    %s400 = scalar_lea.sflag [#allocation4], 1
    %401 = vsyncpa %s400, 1

</llo_original>
